<compile_context>
chip_gen: v5e
topology: v5e:2x2
jax: 0.10.0
libtpu: 0.0.40
codegen_flags: <defaults>
</compile_context>

<pallas_src>
import jax
import jax.numpy as jnp
from jax import lax
from jax.experimental import pallas as pl
from jax.experimental.pallas import tpu as pltpu


# ----------------------------- Pallas kernel --------------------------------

def lora_linear_kernel(x_ref, w_ref, a_ref, b_ref, bias_ref, o_ref,
                       acc_ref, u_ref):
    # Grid = (M tiles, N tiles, K tiles); K is innermost ("arbitrary").
    k = pl.program_id(2)

    @pl.when(k == 0)
    def _init():
        acc_ref[...] = jnp.zeros_like(acc_ref)
        u_ref[...] = jnp.zeros_like(u_ref)

    # Cast in-kernel: MXU-native bf16 inputs, f32 accumulation. Weight stays
    # in its native (out, in) layout -- contract on the K axis of both.
    x = x_ref[...].astype(jnp.bfloat16)          # (tm, tk)
    w = w_ref[...].astype(jnp.bfloat16)          # (tn, tk)
    a = a_ref[...].astype(jnp.bfloat16)          # (r,  tk)

    acc_ref[...] += lax.dot_general(
        x, w, dimension_numbers=(((1,), (1,)), ((), ())),
        preferred_element_type=jnp.float32)      # x @ W^T   -> (tm, tn)

    u_ref[...] += lax.dot_general(
        x, a, dimension_numbers=(((1,), (1,)), ((), ())),
        preferred_element_type=jnp.float32)      # x @ A^T   -> (tm, r)

    @pl.when(k == pl.num_programs(2) - 1)
    def _finalize():
        b = b_ref[...].astype(jnp.bfloat16)      # (tn, r)
        lora = lax.dot_general(
            u_ref[...].astype(jnp.bfloat16), b,
            dimension_numbers=(((1,), (1,)), ((), ())),
            preferred_element_type=jnp.float32)  # (x@A^T) @ B^T -> (tm, tn)
        o_ref[...] = (acc_ref[...] + lora + bias_ref[...]).astype(o_ref.dtype)


# ------------------------------ JAX wrapper ----------------------------------

def _round_up(a, b):
    return (a + b - 1) // b * b


def _pick_tile(n, candidates):
    for c in candidates:
        if n % c == 0:
            return c
    return n  # full extent (allowed: block dim equals array dim)


def _pick_tm(m):
    m8 = _round_up(max(m, 1), 8)
    if m8 <= 512:
        return m8                      # single M tile, no grid overhead
    for cand in (512, 256):            # large tiles if padding waste <= ~6%
        if (_round_up(m, cand) - m) * 16 <= m:
            return cand
    return 128                         # bounds padded rows to < 128


def lora_linear_forward(x, weight, bias, lora_A, lora_B, *, out_dtype=None):
    """Un-merged LoRALinear forward: y = x @ W^T + b + (x @ A^T) @ B^T.

    x:      (..., in_features)            float32
    weight: (out_features, in_features)   (native nn.Linear layout, NOT transposed)
    bias:   (out_features,) or None
    lora_A: (r, in_features)
    lora_B: (out_features, r)
    """
    out_features, in_features = weight.shape
    r = lora_A.shape[0]
    out_dtype = out_dtype or x.dtype

    orig_lead = x.shape[:-1]
    x2 = x.reshape(-1, in_features)
    m = x2.shape[0]

    tm = _pick_tm(m)
    m_pad = _round_up(m, tm)
    if m_pad != m:
        x2 = jnp.pad(x2, ((0, m_pad - m), (0, 0)))

    # N at 256 (v6e MXU-filling, >=2 parallel steps for v7x megacore at real
    # sizes); K at 512/256/128; fall back to the full extent for tiny layers.
    tn = _pick_tile(out_features, (256, 128))
    tk = _pick_tile(in_features, (512, 256, 128))

    if bias is None:
        bias = jnp.zeros((out_features,), jnp.float32)
    bias2d = bias.reshape(1, out_features).astype(jnp.float32)

    grid = (m_pad // tm, out_features // tn, in_features // tk)

    flops = (2 * m_pad * in_features * out_features
             + 2 * m_pad * in_features * r * grid[1]
             + 2 * m_pad * r * out_features)
    bytes_accessed = (m_pad * in_features * 4 * grid[1]       # x re-read per N tile
                      + in_features * out_features * 4 * grid[0]  # W per M tile
                      + r * in_features * 4 + out_features * r * 4
                      + out_features * 4
                      + m_pad * out_features * jnp.dtype(out_dtype).itemsize)

    out_flat = pl.pallas_call(
        lora_linear_kernel,
        out_shape=jax.ShapeDtypeStruct((m_pad, out_features), out_dtype),
        grid=grid,
        in_specs=[
            pl.BlockSpec((tm, tk), lambda i, j, k: (i, k)),   # x
            pl.BlockSpec((tn, tk), lambda i, j, k: (j, k)),   # W (native layout)
            pl.BlockSpec((r, tk), lambda i, j, k: (0, k)),    # lora_A
            pl.BlockSpec((tn, r), lambda i, j, k: (j, 0)),    # lora_B
            pl.BlockSpec((1, tn), lambda i, j, k: (0, j)),    # bias
        ],
        out_specs=pl.BlockSpec((tm, tn), lambda i, j, k: (i, j)),
        scratch_shapes=[
            pltpu.VMEM((tm, tn), jnp.float32),   # base-path accumulator
            pltpu.VMEM((tm, r), jnp.float32),    # low-rank (x @ A^T) accumulator
        ],
        compiler_params=pltpu.CompilerParams(
            dimension_semantics=("parallel", "parallel", "arbitrary")),
        cost_estimate=pl.CostEstimate(
            flops=flops, transcendentals=0, bytes_accessed=bytes_accessed),
    )(x2, weight, lora_A, lora_B, bias2d)

    return out_flat[:m].reshape(*orig_lead, out_features)


# -------------------------------- driver --------------------------------------

if __name__ == "__main__":
    key = jax.random.PRNGKey(0)
    k1, k2, k3, k4, k5 = jax.random.split(key, 5)

    # Small shapes consistent with LoRALinear: tokens = batch*seq, a linear
    # layer in_features -> out_features, low rank r. out_features = 128 keeps
    # the output block lane-dense.
    batch, seq = 2, 8
    in_features, out_features = 32, 128
    r, lora_alpha = 4, 8
    # NOTE: scaling = lora_alpha / r is NOT applied in the module's un-merged
    # forward (only in its merge/unmerge paths), so it is not applied here.

    x = jax.random.normal(k1, (batch, seq, in_features), jnp.float32)
    weight = 0.1 * jax.random.normal(k2, (out_features, in_features), jnp.float32)
    bias = 0.1 * jax.random.normal(k3, (out_features,), jnp.float32)
    # reset_parameters() zeros lora_B; use small random values so the LoRA
    # path actually contributes in this synthetic check.
    lora_A = 0.1 * jax.random.normal(k4, (r, in_features), jnp.float32)
    lora_B = 0.1 * jax.random.normal(k5, (out_features, r), jnp.float32)

    y = lora_linear_forward(x, weight, bias, lora_A, lora_B)
    y = jax.block_until_ready(y)
    assert y.shape == (batch, seq, out_features)

    # Reference: exact module semantics in f32 (HIGHEST precision). The kernel
    # feeds the MXU bf16 inputs (f32 accumulate), so use a bf16-sized tolerance.
    hp = jax.lax.Precision.HIGHEST
    ref = (jnp.dot(x, weight.T, precision=hp)
           + bias
           + jnp.dot(jnp.dot(x, lora_A.T, precision=hp), lora_B.T, precision=hp))
    assert jnp.allclose(y, ref, atol=3e-2, rtol=3e-2), "mismatch vs reference"

    # TODO(synk): lora_dropout / training-mode behavior is not represented
    # (the reference module has no dropout either; this is the eval forward).
    print("KERNEL_OK")
</pallas_src>

<mosaic_0001>
module attributes {stable_mosaic.version = 11 : i64} {
  func.func @lora_linear_kernel(%arg0: i32, %arg1: i32, %arg2: i32, %arg3: memref<16x32xf32, #tpu.memory_space<vmem>>, %arg4: memref<128x32xf32, #tpu.memory_space<vmem>>, %arg5: memref<4x32xf32, #tpu.memory_space<vmem>>, %arg6: memref<128x4xf32, #tpu.memory_space<vmem>>, %arg7: memref<1x128xf32, #tpu.memory_space<vmem>>, %arg8: memref<16x128xf32, #tpu.memory_space<vmem>>, %arg9: memref<16x128xf32, #tpu.memory_space<vmem>>, %arg10: memref<16x4xf32, #tpu.memory_space<vmem>>) attributes {dimension_semantics = [#tpu.dimension_semantics<parallel>, #tpu.dimension_semantics<parallel>, #tpu.dimension_semantics<arbitrary>], iteration_bounds = array<i64: 1, 1, 1>, scalar_prefetch = 0 : i64, scratch_operands = 2 : i64, tpu.core_type = #tpu.core_type<tc>, window_params = [{transform_indices = @transform_0, window_bounds = array<i64: 16, 32>}, {transform_indices = @transform_1, window_bounds = array<i64: 128, 32>}, {transform_indices = @transform_2, window_bounds = array<i64: 4, 32>}, {transform_indices = @transform_3, window_bounds = array<i64: 128, 4>}, {transform_indices = @transform_4, window_bounds = array<i64: 1, 128>}, {transform_indices = @transform_5, window_bounds = array<i64: 16, 128>}]} {
    %c0_i32 = arith.constant 0 : i32
    %0 = arith.cmpi eq, %arg2, %c0_i32 : i32
    %1 = arith.extui %0 : i1 to i32
    %c0_i32_0 = arith.constant 0 : i32
    %2 = arith.cmpi ne, %1, %c0_i32_0 : i32
    scf.if %2 {
      %cst_17 = arith.constant 0.000000e+00 : f32
      %20 = vector.broadcast %cst_17 : f32 to vector<16x128xf32>
      %c0_18 = arith.constant 0 : index
      %c0_19 = arith.constant 0 : index
      %21 = vector.load %arg9[%c0_18, %c0_19] : memref<16x128xf32, #tpu.memory_space<vmem>>, vector<16x128xf32>
      tpu.vector_store %arg9[%c0_18, %c0_19], %20 {strides = array<i32>} : memref<16x128xf32, #tpu.memory_space<vmem>>, vector<16x128xf32>,
      %cst_20 = arith.constant 0.000000e+00 : f32
      %22 = vector.broadcast %cst_20 : f32 to vector<16x4xf32>
      %c0_21 = arith.constant 0 : index
      %c0_22 = arith.constant 0 : index
      %23 = vector.load %arg10[%c0_21, %c0_22] : memref<16x4xf32, #tpu.memory_space<vmem>>, vector<16x4xf32>
      tpu.vector_store %arg10[%c0_21, %c0_22], %22 {strides = array<i32>} : memref<16x4xf32, #tpu.memory_space<vmem>>, vector<16x4xf32>,
    } else {
    }
    %c0 = arith.constant 0 : index
    %c0_1 = arith.constant 0 : index
    %3 = vector.load %arg3[%c0, %c0_1] : memref<16x32xf32, #tpu.memory_space<vmem>>, vector<16x32xf32>
    %4 = arith.truncf %3 : vector<16x32xf32> to vector<16x32xbf16>
    %c0_2 = arith.constant 0 : index
    %c0_3 = arith.constant 0 : index
    %5 = vector.load %arg4[%c0_2, %c0_3] : memref<128x32xf32, #tpu.memory_space<vmem>>, vector<128x32xf32>
    %6 = arith.truncf %5 : vector<128x32xf32> to vector<128x32xbf16>
    %c0_4 = arith.constant 0 : index
    %c0_5 = arith.constant 0 : index
    %7 = vector.load %arg5[%c0_4, %c0_5] : memref<4x32xf32, #tpu.memory_space<vmem>>, vector<4x32xf32>
    %8 = arith.truncf %7 : vector<4x32xf32> to vector<4x32xbf16>
    %c0_6 = arith.constant 0 : index
    %c0_7 = arith.constant 0 : index
    %9 = vector.load %arg9[%c0_6, %c0_7] : memref<16x128xf32, #tpu.memory_space<vmem>>, vector<16x128xf32>
    %cst = arith.constant dense<0.000000e+00> : vector<16x128xf32>
    %10 = tpu.matmul %4, %6, %cst {dimension_numbers = #tpu.dot_dimension_numbers<[1], [1], [0], [0], [0, 0, 1, 0], [], []>} : vector<16x32xbf16>, vector<128x32xbf16>, vector<16x128xf32> -> vector<16x128xf32>
    %11 = arith.addf %9, %10 : vector<16x128xf32>
    %c0_8 = arith.constant 0 : index
    %c0_9 = arith.constant 0 : index
    %12 = vector.load %arg9[%c0_8, %c0_9] : memref<16x128xf32, #tpu.memory_space<vmem>>, vector<16x128xf32>
    tpu.vector_store %arg9[%c0_8, %c0_9], %11 {strides = array<i32>} : memref<16x128xf32, #tpu.memory_space<vmem>>, vector<16x128xf32>,
    %c0_10 = arith.constant 0 : index
    %c0_11 = arith.constant 0 : index
    %13 = vector.load %arg10[%c0_10, %c0_11] : memref<16x4xf32, #tpu.memory_space<vmem>>, vector<16x4xf32>
    %cst_12 = arith.constant dense<0.000000e+00> : vector<16x4xf32>
    %14 = tpu.matmul %4, %8, %cst_12 {dimension_numbers = #tpu.dot_dimension_numbers<[1], [1], [0], [0], [0, 0, 1, 0], [], []>} : vector<16x32xbf16>, vector<4x32xbf16>, vector<16x4xf32> -> vector<16x4xf32>
    %15 = arith.addf %13, %14 : vector<16x4xf32>
    %c0_13 = arith.constant 0 : index
    %c0_14 = arith.constant 0 : index
    %16 = vector.load %arg10[%c0_13, %c0_14] : memref<16x4xf32, #tpu.memory_space<vmem>>, vector<16x4xf32>
    tpu.vector_store %arg10[%c0_13, %c0_14], %15 {strides = array<i32>} : memref<16x4xf32, #tpu.memory_space<vmem>>, vector<16x4xf32>,
    %c0_i32_15 = arith.constant 0 : i32
    %17 = arith.cmpi eq, %arg2, %c0_i32_15 : i32
    %18 = arith.extui %17 : i1 to i32
    %c0_i32_16 = arith.constant 0 : i32
    %19 = arith.cmpi ne, %18, %c0_i32_16 : i32
    scf.if %19 {
      %c0_17 = arith.constant 0 : index
      %c0_18 = arith.constant 0 : index
      %20 = vector.load %arg6[%c0_17, %c0_18] : memref<128x4xf32, #tpu.memory_space<vmem>>, vector<128x4xf32>
      %21 = arith.truncf %20 : vector<128x4xf32> to vector<128x4xbf16>
      %c0_19 = arith.constant 0 : index
      %c0_20 = arith.constant 0 : index
      %22 = vector.load %arg10[%c0_19, %c0_20] : memref<16x4xf32, #tpu.memory_space<vmem>>, vector<16x4xf32>
      %23 = arith.truncf %22 : vector<16x4xf32> to vector<16x4xbf16>
      %cst_21 = arith.constant dense<0.000000e+00> : vector<16x128xf32>
      %24 = tpu.matmul %23, %21, %cst_21 {dimension_numbers = #tpu.dot_dimension_numbers<[1], [1], [0], [0], [0, 0, 1, 0], [], []>} : vector<16x4xbf16>, vector<128x4xbf16>, vector<16x128xf32> -> vector<16x128xf32>
      %c0_22 = arith.constant 0 : index
      %c0_23 = arith.constant 0 : index
      %25 = vector.load %arg9[%c0_22, %c0_23] : memref<16x128xf32, #tpu.memory_space<vmem>>, vector<16x128xf32>
      %26 = arith.addf %25, %24 : vector<16x128xf32>
      %c0_24 = arith.constant 0 : index
      %c0_25 = arith.constant 0 : index
      %27 = vector.load %arg7[%c0_24, %c0_25] : memref<1x128xf32, #tpu.memory_space<vmem>>, vector<1x128xf32>
      %28 = vector.broadcast %27 : vector<1x128xf32> to vector<16x128xf32>
      %29 = arith.addf %26, %28 : vector<16x128xf32>
      %c0_26 = arith.constant 0 : index
      %c0_27 = arith.constant 0 : index
      %30 = vector.load %arg8[%c0_26, %c0_27] : memref<16x128xf32, #tpu.memory_space<vmem>>, vector<16x128xf32>
      tpu.vector_store %arg8[%c0_26, %c0_27], %29 {strides = array<i32>} : memref<16x128xf32, #tpu.memory_space<vmem>>, vector<16x128xf32>,
    } else {
    }
    return
  }
  func.func @transform_0(%arg0: i32, %arg1: i32, %arg2: i32) -> (i32, i32) {
    %c0_i32 = arith.constant 0 : i32
    return %arg0, %arg2 : i32, i32
  }
  func.func @transform_1(%arg0: i32, %arg1: i32, %arg2: i32) -> (i32, i32) {
    %c0_i32 = arith.constant 0 : i32
    return %arg1, %arg2 : i32, i32
  }
  func.func @transform_2(%arg0: i32, %arg1: i32, %arg2: i32) -> (i32, i32) {
    %c0_i32 = arith.constant 0 : i32
    %c0_i32_0 = arith.constant 0 : i32
    return %c0_i32, %arg2 : i32, i32
  }
  func.func @transform_3(%arg0: i32, %arg1: i32, %arg2: i32) -> (i32, i32) {
    %c0_i32 = arith.constant 0 : i32
    %c0_i32_0 = arith.constant 0 : i32
    return %arg1, %c0_i32 : i32, i32
  }
  func.func @transform_4(%arg0: i32, %arg1: i32, %arg2: i32) -> (i32, i32) {
    %c0_i32 = arith.constant 0 : i32
    %c0_i32_0 = arith.constant 0 : i32
    return %c0_i32, %arg1 : i32, i32
  }
  func.func @transform_5(%arg0: i32, %arg1: i32, %arg2: i32) -> (i32, i32) {
    %c0_i32 = arith.constant 0 : i32
    return %arg0, %arg1 : i32, i32
  }
}

</mosaic_0001>

<llo_original>
// kernel: tpu_custom_call.1
$region0: #{tpu_custom_call.1}
  #allocation0 [shape = 'u32[]', space=smem, size = 0x4, offset = 0x4, fixed_abs, tag = 'smem constant byte address 0x4 - core index']
  #allocation1 [shape = 'u32[72,128]{1,0:T(1,128)}', space=vmem, size = 0x9000, scoped, tag = 'internal scratch']
  #allocation2 [shape = 'f32[16,128]{1,0:T(8,128)}', space=vmem, size = 0x2000, scoped, tag = 'scratch operand']
  #allocation3 [shape = 'f32[16,4]{1,0:T(8,128)}', space=vmem, size = 0x2000, scoped, tag = 'scratch operand']
  %s0 = inlined_call_operand.vmem [shape: f32[16,32], index: 0, kind: input, shape index: {}]
  %s1 = inlined_call_operand.vmem [shape: f32[128,32], index: 1, kind: input, shape index: {}]
  %s2 = inlined_call_operand.vmem [shape: f32[4,32], index: 2, kind: input, shape index: {}]
  %s3 = inlined_call_operand.vmem [shape: f32[128,4], index: 3, kind: input, shape index: {}]
  %s4 = inlined_call_operand.vmem [shape: f32[1,128], index: 4, kind: input, shape index: {}]
  %s5 = inlined_call_operand.hbm [shape: f32[16,128], index: 5, kind: output, shape index: {}]
  %s6 = sld [smem:[#allocation0]]
  $region38: #{tpu_custom_call.1} parent=0
    _
  %s8 = ssub.s32 1, %s6
  %s9 = scalar_select 0, %s8, %s6
  $region1: #{tpu_custom_call.1} parent=0
    #allocation4 [shape = 'u8[8192]{0}', space=vmem, size = 0x2000, scoped, tag = 'output window, operand 0, single buffered']
    #allocation5 [shape = 's32[1]{0}', space=sflag, size = 0x4, scoped, tag = 'scoped memory for tpu_custom_call.1']
    %10 = vsyncpa [#allocation5], 0
    // Predicated region
    $region2: #{tpu_custom_call.1} parent=1 // pred_check
      _
    $region3: #{tpu_custom_call.1} parent=1 // pred_check_branch
      %12 = sbr.rel (0) target = $region5
    $region4: #{tpu_custom_call.1} parent=1 // pred_region
      _
    $region5: #{tpu_custom_call.1} parent=1 // pred_fallthru
      _
    // Predicated region
    $region6: #{tpu_custom_call.1} parent=1 // pred_check
      _
    $region7: #{tpu_custom_call.1} parent=1 // pred_check_branch
      %14 = sbr.rel (0) target = $region9
    $region8: #{tpu_custom_call.1} parent=1 // pred_region
      _
    $region9: #{tpu_custom_call.1} parent=1 // pred_fallthru
      _
    // Predicated region
    $region10: #{tpu_custom_call.1} parent=1 // pred_check
      _
    $region11: #{tpu_custom_call.1} parent=1 // pred_check_branch
      %16 = sbr.rel (0) target = $region13
    $region12: #{tpu_custom_call.1} parent=1 // pred_region
      _
    $region13: #{tpu_custom_call.1} parent=1 // pred_fallthru
      _
    // Predicated region
    $region14: #{tpu_custom_call.1} parent=1 // pred_check
      _
    $region15: #{tpu_custom_call.1} parent=1 // pred_check_branch
      %18 = sbr.rel (0) target = $region17
    $region16: #{tpu_custom_call.1} parent=1 // pred_region
      _
    $region17: #{tpu_custom_call.1} parent=1 // pred_fallthru
      _
    // Predicated region
    $region18: #{tpu_custom_call.1} parent=1 // pred_check
      _
    $region19: #{tpu_custom_call.1} parent=1 // pred_check_branch
      %20 = sbr.rel (0) target = $region21
    $region20: #{tpu_custom_call.1} parent=1 // pred_region
      _
    $region21: #{tpu_custom_call.1} parent=1 // pred_fallthru
      _
    %p22 = scmp.eq.s32.totalorder 0, 0
    // Predicated region
    $region22: #{tpu_custom_call.1} parent=1 // pred_check
      %p23 = pneg %p22
    $region23: #{tpu_custom_call.1} parent=1 // pred_check_branch
      %25 = sbr.rel (%p23) target = $region25
    $region24: #{tpu_custom_call.1} parent=1 // pred_region
      %26 = vst [vmem:[#allocation2] sm:$0xff] 0.0
      %27 = vst [vmem:[#allocation2 + $0x8] sm:$0xff] 0.0
      %vm28 = vcmask 31744
      %29 = vst.msk [vmem:[#allocation3] sm:$0xff] %vm28, 0.0
      %30 = vst.msk [vmem:[#allocation3 + $0x8] sm:$0xff] %vm28, 0.0
    $region25: #{tpu_custom_call.1} parent=1 // pred_fallthru
      _
    %v31 = vld [vmem:[%s0] sm:$0xff]
    %v32 = vld [vmem:[%s0 + $0x8] sm:$0xff]
    %v33 = vpack.c.bf16 %v32, %v31
    %v34 = vld [vmem:[%s1] sm:$0xff]
    %v35 = vld [vmem:[%s1 + $0x8] sm:$0xff]
    %v36 = vld [vmem:[%s1 + $0x10] sm:$0xff]
    %v37 = vld [vmem:[%s1 + $0x18] sm:$0xff]
    %v38 = vld [vmem:[%s1 + $0x20] sm:$0xff]
    %v39 = vld [vmem:[%s1 + $0x28] sm:$0xff]
    %v40 = vld [vmem:[%s1 + $0x30] sm:$0xff]
    %v41 = vld [vmem:[%s1 + $0x38] sm:$0xff]
    %v42 = vld [vmem:[%s1 + $0x40] sm:$0xff]
    %v43 = vld [vmem:[%s1 + $0x48] sm:$0xff]
    %v44 = vld [vmem:[%s1 + $0x50] sm:$0xff]
    %v45 = vld [vmem:[%s1 + $0x58] sm:$0xff]
    %v46 = vld [vmem:[%s1 + $0x60] sm:$0xff]
    %v47 = vld [vmem:[%s1 + $0x68] sm:$0xff]
    %v48 = vld [vmem:[%s1 + $0x70] sm:$0xff]
    %v49 = vld [vmem:[%s1 + $0x78] sm:$0xff]
    %v50 = vpack.c.bf16 %v35, %v34
    %v51 = vpack.c.bf16 %v37, %v36
    %v52 = vpack.c.bf16 %v39, %v38
    %v53 = vpack.c.bf16 %v41, %v40
    %v54 = vpack.c.bf16 %v43, %v42
    %v55 = vpack.c.bf16 %v45, %v44
    %v56 = vpack.c.bf16 %v47, %v46
    %v57 = vpack.c.bf16 %v49, %v48
    %v58 = vld [vmem:[%s2] sm:$0xf]
    %v59 = vpack.c.bf16 %v58, %v58
    %v60 = vld [vmem:[#allocation2] sm:$0xff]
    %v61 = vld [vmem:[#allocation2 + $0x8] sm:$0xff]
    %vm62 = vcmask 261120
    %v64 = vsel %vm62, %v33, 0
    %v67 = vsel %vm62, %v50, 0
    %v70 = vsel %vm62, %v51, 0
    %v73 = vsel %vm62, %v52, 0
    %v76 = vsel %vm62, %v53, 0
    %v79 = vsel %vm62, %v54, 0
    %v82 = vsel %vm62, %v55, 0
    %v85 = vsel %vm62, %v56, 0
    %v88 = vsel %vm62, %v57, 0
    %90 = vmatpush.bf16.xpose.msra.mxu0 %v88
    %91 = vmatpush.bf16.xpose.msra.mxu0 %v85
    %92 = vmatpush.bf16.xpose.msra.mxu0 %v82
    %93 = vmatpush.bf16.xpose.msra.mxu0 %v79
    %94 = vmatpush.bf16.xpose.msra.mxu0 %v76
    %95 = vmatpush.bf16.xpose.msra.mxu0 %v73
    %96 = vmatpush.bf16.xpose.msra.mxu0 %v70
    %97 = vmatpush.bf16.xpose.msra.mxu0 %v67
    %98 = vmatmul.bf16.gmra.mxu0 %v64
    %v99 = vpop.f32.mrf.mxu0
    %v100 = vadd.f32 0.0, %v99
    %v101 = vpop.f32.mrf.mxu0
    %v102 = vadd.f32 0.0, %v101
    %103 = vdwg.mxu0
    %v104 = vadd.f32 %v60, %v100
    %v105 = vadd.f32 %v61, %v102
    %106 = vst [vmem:[#allocation2] sm:$0xff] %v104
    %107 = vst [vmem:[#allocation2 + $0x8] sm:$0xff] %v105
    %v108 = vld [vmem:[#allocation3] sm:$0xff]
    %v109 = vld [vmem:[#allocation3 + $0x8] sm:$0xff]
    %v111 = vsel %vm62, %v59, 0
    %113 = vmatpush.bf16.xpose.msra.mxu0 0
    %114 = vmatpush.bf16.xpose.msra.mxu0 0
    %115 = vmatpush.bf16.xpose.msra.mxu0 0
    %116 = vmatpush.bf16.xpose.msra.mxu0 0
    %117 = vmatpush.bf16.xpose.msra.mxu0 0
    %118 = vmatpush.bf16.xpose.msra.mxu0 0
    %119 = vmatpush.bf16.xpose.msra.mxu0 0
    %120 = vmatpush.bf16.xpose.msra.mxu0 %v111
    %121 = vmatmul.bf16.gmra.mxu0 %v64
    %v122 = vpop.f32.mrf.mxu0
    %v123 = vadd.f32 0.0, %v122
    %v124 = vpop.f32.mrf.mxu0
    %v125 = vadd.f32 0.0, %v124
    %126 = vdwg.mxu0
    %v127 = vadd.f32 %v108, %v123
    %v128 = vadd.f32 %v109, %v125
    %vm129 = vcmask 31744
    %130 = vst.msk [vmem:[#allocation3] sm:$0xff] %vm129, %v127
    %131 = vst.msk [vmem:[#allocation3 + $0x8] sm:$0xff] %vm129, %v128
    // Predicated region
    $region26: #{tpu_custom_call.1} parent=1 // pred_check
      %p132 = pneg %p22
    $region27: #{tpu_custom_call.1} parent=1 // pred_check_branch
      %134 = sbr.rel (%p132) target = $region29
    $region28: #{tpu_custom_call.1} parent=1 // pred_region
      %v135 = vld [vmem:[%s3] sm:$0xff]
      %v136 = vld [vmem:[%s3 + $0x8] sm:$0xff]
      %v137 = vld [vmem:[%s3 + $0x10] sm:$0xff]
      %v138 = vld [vmem:[%s3 + $0x18] sm:$0xff]
      %v139 = vld [vmem:[%s3 + $0x20] sm:$0xff]
      %v140 = vld [vmem:[%s3 + $0x28] sm:$0xff]
      %v141 = vld [vmem:[%s3 + $0x30] sm:$0xff]
      %v142 = vld [vmem:[%s3 + $0x38] sm:$0xff]
      %v143 = vld [vmem:[%s3 + $0x40] sm:$0xff]
      %v144 = vld [vmem:[%s3 + $0x48] sm:$0xff]
      %v145 = vld [vmem:[%s3 + $0x50] sm:$0xff]
      %v146 = vld [vmem:[%s3 + $0x58] sm:$0xff]
      %v147 = vld [vmem:[%s3 + $0x60] sm:$0xff]
      %v148 = vld [vmem:[%s3 + $0x68] sm:$0xff]
      %v149 = vld [vmem:[%s3 + $0x70] sm:$0xff]
      %v150 = vld [vmem:[%s3 + $0x78] sm:$0xff]
      %v151 = vpack.c.bf16 %v136, %v135
      %v152 = vpack.c.bf16 %v138, %v137
      %v153 = vpack.c.bf16 %v140, %v139
      %v154 = vpack.c.bf16 %v142, %v141
      %v155 = vpack.c.bf16 %v144, %v143
      %v156 = vpack.c.bf16 %v146, %v145
      %v157 = vpack.c.bf16 %v148, %v147
      %v158 = vpack.c.bf16 %v150, %v149
      %v159 = vld [vmem:[#allocation3] sm:$0xff]
      %v160 = vld [vmem:[#allocation3 + $0x8] sm:$0xff]
      %v161 = vpack.c.bf16 %v160, %v159
      %v163 = vsel %vm129, %v161, 0
      %v166 = vsel %vm129, %v151, 0
      %v169 = vsel %vm129, %v152, 0
      %v172 = vsel %vm129, %v153, 0
      %v175 = vsel %vm129, %v154, 0
      %v178 = vsel %vm129, %v155, 0
      %v181 = vsel %vm129, %v156, 0
      %v184 = vsel %vm129, %v157, 0
      %v187 = vsel %vm129, %v158, 0
      %189 = vmatpush.bf16.xpose.msra.mxu0 %v187
      %190 = vmatpush.bf16.xpose.msra.mxu0 %v184
      %191 = vmatpush.bf16.xpose.msra.mxu0 %v181
      %192 = vmatpush.bf16.xpose.msra.mxu0 %v178
      %193 = vmatpush.bf16.xpose.msra.mxu0 %v175
      %194 = vmatpush.bf16.xpose.msra.mxu0 %v172
      %195 = vmatpush.bf16.xpose.msra.mxu0 %v169
      %196 = vmatpush.bf16.xpose.msra.mxu0 %v166
      %197 = vmatmul.bf16.gmra.mxu0 %v163
      %v198 = vpop.f32.mrf.mxu0
      %v199 = vadd.f32 0.0, %v198
      %v200 = vpop.f32.mrf.mxu0
      %v201 = vadd.f32 0.0, %v200
      %202 = vdwg.mxu0
      %v203 = vld [vmem:[#allocation2] sm:$0xff]
      %v204 = vld [vmem:[#allocation2 + $0x8] sm:$0xff]
      %v205 = vadd.f32 %v203, %v199
      %v206 = vadd.f32 %v204, %v201
      %v207 = vld [vmem:[%s4] sm:$0x1]
      %v209 = vperm.slane %v207, 0
      %v211 = vadd.f32 %v205, %v209
      %v212 = vadd.f32 %v206, %v209
      %213 = vst [vmem:[#allocation4] sm:$0xff] %v211
      %214 = vst [vmem:[#allocation4 + $0x8] sm:$0xff] %v212
    $region29: #{tpu_custom_call.1} parent=1 // pred_fallthru
      _
    // Predicated region
    $region30: #{tpu_custom_call.1} parent=1 // pred_check
      _
    $region31: #{tpu_custom_call.1} parent=1 // pred_check_branch
      %216 = sbr.rel (0) target = $region33
    $region32: #{tpu_custom_call.1} parent=1 // pred_region
      %218 = vsyncadd [#allocation5], 0
      %s219 = sshll.u32 [#allocation4], 4
      %s220 = int_to_ptr.vmem [resolvable:$true] %s219
      %s221 = sshll.u32 %s5, 4
      %s222 = int_to_ptr.hbm [resolvable:$true] %s221
      %227 = dma.vmem_to_hbm [thread:$0]  %s220, 256, %s222, [#allocation5], 128, 128, 8
    $region33: #{tpu_custom_call.1} parent=1 // pred_fallthru
      _
    // Predicated region
    $region34: #{tpu_custom_call.1} parent=1 // pred_check
      _
    $region35: #{tpu_custom_call.1} parent=1 // pred_check_branch
      %229 = sbr.rel (0) target = $region37
    $region36: #{tpu_custom_call.1} parent=1 // pred_region
      %231 = dma.done [#allocation5], 256
    $region37: #{tpu_custom_call.1} parent=1 // pred_fallthru
      _
    %232 = vsyncpa [#allocation5], 1

</llo_original>
